<compile_context>
chip_gen: v5e
topology: v5e:2x2
jax: 0.10.0
libtpu: 0.0.40
codegen_flags: <defaults>
</compile_context>

<pallas_src>
import numpy as np
import jax
import jax.numpy as jnp
from jax.experimental import pallas as pl
from jax.experimental.pallas import tpu as pltpu


def _make_outconv_kernel(img_w: int, b_tile: int, c_pad: int, hw: int):
    """Build the kernel body, closing over static shape parameters."""

    def kernel(x_ref, w_ref, b_ref, m_ref, o_ref):
        # x_ref: (B_TILE, C_pad, HW)  batch tile, channels on sublanes, H*W on lanes
        # w_ref: (O, 9*C_pad)         im2col weights, column = (kh*3 + kw)*C_pad + c
        # b_ref: (O, 1)               bias (broadcast over lanes)
        # m_ref: (9, HW)              per-tap boundary masks (1 inside, 0 at halo)
        # o_ref: (B_TILE, O, HW)      lane-dense output block (NCHW order)
        # Free reshape: collapse (B, C_pad) onto sublanes (C_pad is a multiple of 8).
        x2 = x_ref[...].reshape(b_tile * c_pad, hw)
        masks = m_ref[...]                                  # (9, HW)

        taps = []
        t = 0
        for dh in (-1, 0, 1):
            for dw in (-1, 0, 1):
                off = dh * img_w + dw
                # shifted[pos] = x[pos + off]; lane rotation on the XLU.  Wrapped
                # lanes are exactly the out-of-image taps and get masked to 0.
                if off == 0:
                    rolled = x2                             # center tap
                else:
                    rolled = pltpu.roll(x2, shift=(-off) % hw, axis=1)
                if t != 4:                                  # center mask is all ones
                    rolled = rolled * masks[t:t + 1, :]
                taps.append(rolled.reshape(b_tile, c_pad, hw))
                t += 1

        # (B_TILE, 9*C_pad, HW); each tap is a full 8-sublane-aligned group.
        patches = jnp.concatenate(taps, axis=1)

        w = w_ref[...]                                      # (O, 9*C_pad)
        bias = b_ref[...]                                   # (O, 1)
        # One lane-dense MXU contraction per batch element (B_TILE is small &
        # static, so this unrolls).  Do NOT transpose to "fill" the MXU: that
        # would make the output lane-sparse (O lanes), which costs more.
        for b in range(b_tile):
            acc = jnp.dot(w, patches[b], preferred_element_type=jnp.float32)
            o_ref[b] = (acc + bias).astype(o_ref.dtype)     # (O, HW)

    return kernel


def _tap_masks(H: int, W: int, dtype) -> jax.Array:
    """(9, H*W) masks: 1 where tap (dh, dw) reads inside the image, 0 at the zero-pad."""
    hh = np.repeat(np.arange(H), W)
    ww = np.tile(np.arange(W), H)
    rows = []
    for dh in (-1, 0, 1):
        for dw in (-1, 0, 1):
            rows.append((hh + dh >= 0) & (hh + dh < H) &
                        (ww + dw >= 0) & (ww + dw < W))
    return jnp.asarray(np.stack(rows, axis=0).astype(np.float32)).astype(dtype)


def _pick_batch_tile(N: int, C_pad: int, O: int, HW: int, itemsize: int) -> int:
    """Largest batch tile that divides N, fits a conservative VMEM budget, and
    keeps >= 2 grid blocks when N >= 2 (so v7x's 2 TensorCores both engage)."""
    budget = 6 * 1024 * 1024          # well under v5e's 16 MiB scoped default
    best = 1
    for bt in range(1, min(N, 8) + 1):
        if N % bt != 0:
            continue
        if N >= 2 and N // bt < 2:
            continue                   # keep the parallel axis >= 2 blocks (v7x)
        per_step = bt * HW * itemsize * (2 * C_pad + 2 * O)   # dbl-buffered in/out
        per_step += bt * HW * 4 * (9 * C_pad + O)             # patches + f32 acc
        if per_step <= budget:
            best = bt
    return best


def out_conv(x_nchw, weight, bias):
    """x_nchw: (N, C, H, W); weight: (O, C, 3, 3); bias: (O,). Returns (N, O, H, W)."""
    N, C, H, W = x_nchw.shape
    O = weight.shape[0]
    HW = H * W
    C_pad = ((C + 7) // 8) * 8        # full 8-sublane groups per tap (f32 packing)

    # Free, contiguous reshape: NCHW stays NCHW, spatial flattened onto lanes.
    x_flat = x_nchw.reshape(N, C, HW)
    if C_pad != C:
        # Zero-pad channels so each im2col tap is vreg-aligned in sublanes.
        x_flat = jnp.pad(x_flat, ((0, 0), (0, C_pad - C), (0, 0)))

    # Tiny parameter reshapes: (O,C,3,3) -> (O, 9*C_pad), column index
    # (kh*3 + kw)*C_pad + c, matching the tap order used in the kernel.
    w_t = jnp.transpose(weight, (0, 2, 3, 1))               # (O, 3, 3, C)
    if C_pad != C:
        w_t = jnp.pad(w_t, ((0, 0), (0, 0), (0, 0), (0, C_pad - C)))
    w_mat = w_t.reshape(O, 9 * C_pad)
    b_col = bias.reshape(O, 1)
    masks = _tap_masks(H, W, x_nchw.dtype)                  # (9, HW)

    itemsize = jnp.dtype(x_nchw.dtype).itemsize
    B_TILE = _pick_batch_tile(N, C_pad, O, HW, itemsize)
    grid = (N // B_TILE,)

    kernel = _make_outconv_kernel(W, B_TILE, C_pad, HW)

    out_flat = pl.pallas_call(
        kernel,
        out_shape=jax.ShapeDtypeStruct((N, O, HW), x_nchw.dtype),
        grid_spec=pltpu.PrefetchScalarGridSpec(
            num_scalar_prefetch=0,
            grid=grid,
            in_specs=[
                pl.BlockSpec((B_TILE, C_pad, HW), lambda n: (n, 0, 0)),
                pl.BlockSpec((O, 9 * C_pad), lambda n: (0, 0)),
                pl.BlockSpec((O, 1), lambda n: (0, 0)),
                pl.BlockSpec((9, HW), lambda n: (0, 0)),
            ],
            out_specs=pl.BlockSpec((B_TILE, O, HW), lambda n: (n, 0, 0)),
        ),
        compiler_params=pltpu.CompilerParams(
            dimension_semantics=("parallel",),     # batch axis shards across v7x cores
            vmem_limit_bytes=32 * 1024 * 1024),    # lift v5e's 16 MiB scoped default
    )(x_flat, w_mat, b_col, masks)

    # Free reshape back to (N, O, H, W) — already NCHW-ordered, no transpose.
    return out_flat.reshape(N, O, H, W)


if __name__ == "__main__":
    key = jax.random.PRNGKey(0)
    k_x, k_w, k_b = jax.random.split(key, 3)

    N, C_in, C_out, H, W = 2, 4, 3, 16, 16

    x = jax.random.normal(k_x, (N, C_in, H, W), dtype=jnp.float32)
    # Deterministic "PyTorch-like" uniform init for Conv2d(3x3) parameters.
    fan_in = C_in * 3 * 3
    bound = 1.0 / (fan_in ** 0.5)
    weight = jax.random.uniform(k_w, (C_out, C_in, 3, 3), jnp.float32,
                                minval=-bound, maxval=bound)
    bias = jax.random.uniform(k_b, (C_out,), jnp.float32,
                              minval=-bound, maxval=bound)

    out = out_conv(x, weight, bias)
    jax.block_until_ready(out)

    # Sanity-check against XLA's conv (high-precision reference).
    ref = jax.lax.conv_general_dilated(
        x, weight, window_strides=(1, 1), padding=((1, 1), (1, 1)),
        dimension_numbers=("NCHW", "OIHW", "NCHW"),
        precision=jax.lax.Precision.HIGHEST) + bias.reshape(1, C_out, 1, 1)
    assert out.shape == (N, C_out, H, W)
    assert jnp.allclose(out, ref, atol=1e-3, rtol=1e-3)
    print("KERNEL_OK")
</pallas_src>

<mosaic_0001>
module attributes {stable_mosaic.version = 11 : i64} {
  func.func @kernel(%arg0: i32, %arg1: memref<1x8x256xf32, #tpu.memory_space<vmem>>, %arg2: memref<3x72xf32, #tpu.memory_space<vmem>>, %arg3: memref<3x1xf32, #tpu.memory_space<vmem>>, %arg4: memref<9x256xf32, #tpu.memory_space<vmem>>, %arg5: memref<1x3x256xf32, #tpu.memory_space<vmem>>) attributes {dimension_semantics = [#tpu.dimension_semantics<parallel>], iteration_bounds = array<i64: 2>, scalar_prefetch = 0 : i64, scratch_operands = 0 : i64, tpu.core_type = #tpu.core_type<tc>, window_params = [{transform_indices = @transform_0, window_bounds = array<i64: 1, 8, 256>}, {pipeline_mode = #tpu.pipeline_mode<synchronous>, transform_indices = @transform_1, window_bounds = array<i64: 3, 72>}, {pipeline_mode = #tpu.pipeline_mode<synchronous>, transform_indices = @transform_2, window_bounds = array<i64: 3, 1>}, {pipeline_mode = #tpu.pipeline_mode<synchronous>, transform_indices = @transform_3, window_bounds = array<i64: 9, 256>}, {transform_indices = @transform_4, window_bounds = array<i64: 1, 3, 256>}]} {
    %c0 = arith.constant 0 : index
    %c0_0 = arith.constant 0 : index
    %c0_1 = arith.constant 0 : index
    %0 = vector.load %arg1[%c0, %c0_0, %c0_1] : memref<1x8x256xf32, #tpu.memory_space<vmem>>, vector<1x8x256xf32>
    %1 = vector.shape_cast %0 : vector<1x8x256xf32> to vector<8x256xf32>
    %c0_2 = arith.constant 0 : index
    %c0_3 = arith.constant 0 : index
    %2 = vector.load %arg4[%c0_2, %c0_3] : memref<9x256xf32, #tpu.memory_space<vmem>>, vector<9x256xf32>
    %c17_i32 = arith.constant 17 : i32
    %3 = tpu.dynamic_rotate %1 by %c17_i32 dim 1 : vector<8x256xf32>, i32 -> vector<8x256xf32>
    %4 = vector.extract_strided_slice %2 {offsets = [0, 0], sizes = [1, 256], strides = [1, 1]} : vector<9x256xf32> to vector<1x256xf32>
    %5 = vector.broadcast %4 : vector<1x256xf32> to vector<8x256xf32>
    %6 = arith.mulf %3, %5 : vector<8x256xf32>
    %7 = vector.shape_cast %6 : vector<8x256xf32> to vector<1x8x256xf32>
    %c16_i32 = arith.constant 16 : i32
    %8 = tpu.dynamic_rotate %1 by %c16_i32 dim 1 : vector<8x256xf32>, i32 -> vector<8x256xf32>
    %9 = vector.extract_strided_slice %2 {offsets = [1, 0], sizes = [1, 256], strides = [1, 1]} : vector<9x256xf32> to vector<1x256xf32>
    %10 = vector.broadcast %9 : vector<1x256xf32> to vector<8x256xf32>
    %11 = arith.mulf %8, %10 : vector<8x256xf32>
    %12 = vector.shape_cast %11 : vector<8x256xf32> to vector<1x8x256xf32>
    %c15_i32 = arith.constant 15 : i32
    %13 = tpu.dynamic_rotate %1 by %c15_i32 dim 1 : vector<8x256xf32>, i32 -> vector<8x256xf32>
    %14 = vector.extract_strided_slice %2 {offsets = [2, 0], sizes = [1, 256], strides = [1, 1]} : vector<9x256xf32> to vector<1x256xf32>
    %15 = vector.broadcast %14 : vector<1x256xf32> to vector<8x256xf32>
    %16 = arith.mulf %13, %15 : vector<8x256xf32>
    %17 = vector.shape_cast %16 : vector<8x256xf32> to vector<1x8x256xf32>
    %c1_i32 = arith.constant 1 : i32
    %18 = tpu.dynamic_rotate %1 by %c1_i32 dim 1 : vector<8x256xf32>, i32 -> vector<8x256xf32>
    %19 = vector.extract_strided_slice %2 {offsets = [3, 0], sizes = [1, 256], strides = [1, 1]} : vector<9x256xf32> to vector<1x256xf32>
    %20 = vector.broadcast %19 : vector<1x256xf32> to vector<8x256xf32>
    %21 = arith.mulf %18, %20 : vector<8x256xf32>
    %22 = vector.shape_cast %21 : vector<8x256xf32> to vector<1x8x256xf32>
    %23 = vector.shape_cast %1 : vector<8x256xf32> to vector<1x8x256xf32>
    %c255_i32 = arith.constant 255 : i32
    %24 = tpu.dynamic_rotate %1 by %c255_i32 dim 1 : vector<8x256xf32>, i32 -> vector<8x256xf32>
    %25 = vector.extract_strided_slice %2 {offsets = [5, 0], sizes = [1, 256], strides = [1, 1]} : vector<9x256xf32> to vector<1x256xf32>
    %26 = vector.broadcast %25 : vector<1x256xf32> to vector<8x256xf32>
    %27 = arith.mulf %24, %26 : vector<8x256xf32>
    %28 = vector.shape_cast %27 : vector<8x256xf32> to vector<1x8x256xf32>
    %c241_i32 = arith.constant 241 : i32
    %29 = tpu.dynamic_rotate %1 by %c241_i32 dim 1 : vector<8x256xf32>, i32 -> vector<8x256xf32>
    %30 = vector.extract_strided_slice %2 {offsets = [6, 0], sizes = [1, 256], strides = [1, 1]} : vector<9x256xf32> to vector<1x256xf32>
    %31 = vector.broadcast %30 : vector<1x256xf32> to vector<8x256xf32>
    %32 = arith.mulf %29, %31 : vector<8x256xf32>
    %33 = vector.shape_cast %32 : vector<8x256xf32> to vector<1x8x256xf32>
    %c240_i32 = arith.constant 240 : i32
    %34 = tpu.dynamic_rotate %1 by %c240_i32 dim 1 : vector<8x256xf32>, i32 -> vector<8x256xf32>
    %35 = vector.extract_strided_slice %2 {offsets = [7, 0], sizes = [1, 256], strides = [1, 1]} : vector<9x256xf32> to vector<1x256xf32>
    %36 = vector.broadcast %35 : vector<1x256xf32> to vector<8x256xf32>
    %37 = arith.mulf %34, %36 : vector<8x256xf32>
    %38 = vector.shape_cast %37 : vector<8x256xf32> to vector<1x8x256xf32>
    %c239_i32 = arith.constant 239 : i32
    %39 = tpu.dynamic_rotate %1 by %c239_i32 dim 1 : vector<8x256xf32>, i32 -> vector<8x256xf32>
    %40 = vector.extract_strided_slice %2 {offsets = [8, 0], sizes = [1, 256], strides = [1, 1]} : vector<9x256xf32> to vector<1x256xf32>
    %41 = vector.broadcast %40 : vector<1x256xf32> to vector<8x256xf32>
    %42 = arith.mulf %39, %41 : vector<8x256xf32>
    %43 = vector.shape_cast %42 : vector<8x256xf32> to vector<1x8x256xf32>
    %44 = tpu.concatenate %7, %12, %17, %22, %23, %28, %33, %38, %43 in 1 : vector<1x8x256xf32>, vector<1x8x256xf32>, vector<1x8x256xf32>, vector<1x8x256xf32>, vector<1x8x256xf32>, vector<1x8x256xf32>, vector<1x8x256xf32>, vector<1x8x256xf32>, vector<1x8x256xf32> -> vector<1x72x256xf32>
    %c0_4 = arith.constant 0 : index
    %c0_5 = arith.constant 0 : index
    %45 = vector.load %arg2[%c0_4, %c0_5] : memref<3x72xf32, #tpu.memory_space<vmem>>, vector<3x72xf32>
    %c0_6 = arith.constant 0 : index
    %c0_7 = arith.constant 0 : index
    %46 = vector.load %arg3[%c0_6, %c0_7] : memref<3x1xf32, #tpu.memory_space<vmem>>, vector<3x1xf32>
    %47 = vector.shape_cast %44 : vector<1x72x256xf32> to vector<72x256xf32>
    %cst = arith.constant dense<0.000000e+00> : vector<3x256xf32>
    %48 = tpu.matmul %45, %47, %cst {dimension_numbers = #tpu.dot_dimension_numbers<[1], [0], [0], [1], [0, 0, 1, 1], [], []>} : vector<3x72xf32>, vector<72x256xf32>, vector<3x256xf32> -> vector<3x256xf32>
    %49 = vector.broadcast %46 : vector<3x1xf32> to vector<3x256xf32>
    %50 = arith.addf %48, %49 : vector<3x256xf32>
    %c0_8 = arith.constant 0 : index
    %c0_9 = arith.constant 0 : index
    %c0_10 = arith.constant 0 : index
    %51 = vector.load %arg5[%c0_8, %c0_9, %c0_10] : memref<1x3x256xf32, #tpu.memory_space<vmem>>, vector<1x3x256xf32>
    %52 = vector.shape_cast %51 : vector<1x3x256xf32> to vector<3x256xf32>
    %53 = vector.shape_cast %50 : vector<3x256xf32> to vector<1x3x256xf32>
    tpu.vector_store %arg5[%c0_8, %c0_9, %c0_10], %53 {strides = array<i32>} : memref<1x3x256xf32, #tpu.memory_space<vmem>>, vector<1x3x256xf32>,
    return
  }
  func.func @transform_0(%arg0: i32) -> (i32, i32, i32) {
    %c0_i32 = arith.constant 0 : i32
    %c0_i32_0 = arith.constant 0 : i32
    %c0_i32_1 = arith.constant 0 : i32
    return %arg0, %c0_i32, %c0_i32_0 : i32, i32, i32
  }
  func.func @transform_1(%arg0: i32) -> (i32, i32) {
    %c0_i32 = arith.constant 0 : i32
    %c0_i32_0 = arith.constant 0 : i32
    %c0_i32_1 = arith.constant 0 : i32
    return %c0_i32, %c0_i32_0 : i32, i32
  }
  func.func @transform_2(%arg0: i32) -> (i32, i32) {
    %c0_i32 = arith.constant 0 : i32
    %c0_i32_0 = arith.constant 0 : i32
    %c0_i32_1 = arith.constant 0 : i32
    return %c0_i32, %c0_i32_0 : i32, i32
  }
  func.func @transform_3(%arg0: i32) -> (i32, i32) {
    %c0_i32 = arith.constant 0 : i32
    %c0_i32_0 = arith.constant 0 : i32
    %c0_i32_1 = arith.constant 0 : i32
    return %c0_i32, %c0_i32_0 : i32, i32
  }
  func.func @transform_4(%arg0: i32) -> (i32, i32, i32) {
    %c0_i32 = arith.constant 0 : i32
    %c0_i32_0 = arith.constant 0 : i32
    %c0_i32_1 = arith.constant 0 : i32
    return %arg0, %c0_i32, %c0_i32_0 : i32, i32, i32
  }
}

</mosaic_0001>

<llo_original>
// kernel: tpu_custom_call.1
$region0: #{tpu_custom_call.1}
  #allocation0 [shape = 'u32[]', space=smem, size = 0x4, offset = 0x4, fixed_abs, tag = 'smem constant byte address 0x4 - core index']
  #allocation1 [shape = 'u32[72,128]{1,0:T(1,128)}', space=vmem, size = 0x9000, scoped, tag = 'internal scratch']
  %s0 = inlined_call_operand.hbm [shape: f32[2,8,256], index: 0, kind: input, shape index: {}]
  %s1 = inlined_call_operand.vmem [shape: f32[3,72], index: 1, kind: input, shape index: {}]
  %s2 = inlined_call_operand.vmem [shape: f32[3,1], index: 2, kind: input, shape index: {}]
  %s3 = inlined_call_operand.hbm [shape: f32[9,256], index: 3, kind: input, shape index: {}]
  %s4 = inlined_call_operand.vmem [shape: f32[2,3,256], index: 4, kind: output, shape index: {}]
  %s5 = sld [smem:[#allocation0]]
  $region57: #{tpu_custom_call.1} parent=0
    _
  %s7 = ssub.s32 1, %s5
  %s8 = scalar_select 0, %s7, %s5
  $region1: #{tpu_custom_call.1} parent=0
    #allocation2 [shape = 'u8[16384]{0}', space=vmem, size = 0x4000, scoped, tag = 'input window, operand 0']
    #allocation3 [shape = 's32[2]{0}', space=sflag, size = 0x8, scoped, tag = 'scoped memory for tpu_custom_call.1']
    #allocation4 [shape = 'u8[16384]{0}', space=vmem, size = 0x4000, scoped, tag = 'input window, operand 3, single buffered']
    #allocation5 [shape = 's32[1]{0}', space=sflag, size = 0x4, scoped, tag = 'scoped memory for tpu_custom_call.1']
    %9 = vsyncpa [#allocation3], 0
    %s10 = scalar_lea.sflag [#allocation3], 1
    %11 = vsyncpa %s10, 0
    %12 = vsyncpa [#allocation5], 0
    loop: start=0, step=1, limit=4
    $region2: #{tpu_custom_call.1} parent=1 // loop_pre_header
      _
    $region3: #{tpu_custom_call.1} parent=1 // loop_header
      %s14 = sphi 0, %s18
      %p15 = scmp.ge.s32.totalorder %s14, 4
      %s24 = sphi 0, %s26
      %s27 = sphi 0, %s24
      %s28 = sphi 0, %s27
      %s44 = sphi 0, %s28
      %s48 = sphi 0, %s48
      %s50 = sphi 0, %s48
      %s51 = sphi 0, %s50
      %s65 = sphi 0, %s51
      %s69 = sphi 0, %s69
      %s71 = sphi 0, %s69
      %s72 = sphi 0, %s71
      %s86 = sphi 0, %s72
      %s90 = sphi 0, %s90
      %s92 = sphi 0, %s90
      %s93 = sphi 0, %s92
      %s107 = sphi 0, %s93
      %s113 = sphi 0, %s115
      %s116 = sphi 0, %s113
      %s117 = sphi 0, %s116
      %s133 = sphi 0, %s117
    $region4: #{tpu_custom_call.1} parent=1 // loop_header_branch
      %17 = sbr.rel (%p15) target = $region8
    $region5: #{tpu_custom_call.1} parent=1 // loop_body
      %s19 = ssub.s32 %s14, 1
      %s20 = ssub.s32 %s14, 2
      %s21 = sadd.s32 %s14, 1
      %s22 = ssub.s32 %s14, %s21
      %p23 = scmp.eq.s32.totalorder %s22, 0
      %s25 = sadd.s32 %s24, 1
      %s26 = scalar_select %p23, %s24, %s25
      %p29 = pneg %p23
      %p30 = scmp.eq.s32.totalorder %s14, 1
      %p31 = por %p29, %p30
      %p32 = scmp.ne.s32.totalorder %s24, %s27
      %p33 = scmp.eq.s32.totalorder %s14, 0
      %p34 = por %p32, %p33
      %p35 = scmp.ne.s32.totalorder %s24, %s27
      %p36 = scmp.eq.s32.totalorder %s19, 1
      %p37 = por %p35, %p36
      %p38 = scmp.ne.s32.totalorder %s27, %s28
      %p39 = scmp.eq.s32.totalorder %s19, 0
      %p40 = por %p38, %p39
      %p41 = scmp.ne.s32.totalorder %s27, %s28
      %p42 = scmp.eq.s32.totalorder %s20, 1
      %p43 = por %p41, %p42
      %p45 = scmp.ne.s32.totalorder %s28, %s44
      %p46 = scmp.eq.s32.totalorder %s20, 0
      %p47 = por %p45, %p46
      %s49 = sadd.s32 %s48, 1
      %p52 = scmp.eq.s32.totalorder %s14, 1
      %p53 = scmp.ne.s32.totalorder %s48, %s50
      %p54 = scmp.eq.s32.totalorder %s14, 0
      %p55 = por %p53, %p54
      %p56 = scmp.ne.s32.totalorder %s48, %s50
      %p57 = scmp.eq.s32.totalorder %s19, 1
      %p58 = por %p56, %p57
      %p59 = scmp.ne.s32.totalorder %s50, %s51
      %p60 = scmp.eq.s32.totalorder %s19, 0
      %p61 = por %p59, %p60
      %p62 = scmp.ne.s32.totalorder %s50, %s51
      %p63 = scmp.eq.s32.totalorder %s20, 1
      %p64 = por %p62, %p63
      %p66 = scmp.ne.s32.totalorder %s51, %s65
      %p67 = scmp.eq.s32.totalorder %s20, 0
      %p68 = por %p66, %p67
      %s70 = sadd.s32 %s69, 1
      %p73 = scmp.eq.s32.totalorder %s14, 1
      %p74 = scmp.ne.s32.totalorder %s69, %s71
      %p75 = scmp.eq.s32.totalorder %s14, 0
      %p76 = por %p74, %p75
      %p77 = scmp.ne.s32.totalorder %s69, %s71
      %p78 = scmp.eq.s32.totalorder %s19, 1
      %p79 = por %p77, %p78
      %p80 = scmp.ne.s32.totalorder %s71, %s72
      %p81 = scmp.eq.s32.totalorder %s19, 0
      %p82 = por %p80, %p81
      %p83 = scmp.ne.s32.totalorder %s71, %s72
      %p84 = scmp.eq.s32.totalorder %s20, 1
      %p85 = por %p83, %p84
      %p87 = scmp.ne.s32.totalorder %s72, %s86
      %p88 = scmp.eq.s32.totalorder %s20, 0
      %p89 = por %p87, %p88
      %s91 = sadd.s32 %s90, 1
      %p94 = scmp.eq.s32.totalorder %s14, 1
      %p95 = scmp.ne.s32.totalorder %s90, %s92
      %p96 = scmp.eq.s32.totalorder %s14, 0
      %p97 = por %p95, %p96
      %p98 = scmp.ne.s32.totalorder %s90, %s92
      %p99 = scmp.eq.s32.totalorder %s19, 1
      %p100 = por %p98, %p99
      %p101 = scmp.ne.s32.totalorder %s92, %s93
      %p102 = scmp.eq.s32.totalorder %s19, 0
      %p103 = por %p101, %p102
      %p104 = scmp.ne.s32.totalorder %s92, %s93
      %p105 = scmp.eq.s32.totalorder %s20, 1
      %p106 = por %p104, %p105
      %p108 = scmp.ne.s32.totalorder %s93, %s107
      %p109 = scmp.eq.s32.totalorder %s20, 0
      %p110 = por %p108, %p109
      %s111 = ssub.s32 %s14, %s21
      %p112 = scmp.eq.s32.totalorder %s111, 0
      %s114 = sadd.s32 %s113, 1
      %s115 = scalar_select %p112, %s113, %s114
      %p118 = pneg %p112
      %p119 = scmp.eq.s32.totalorder %s14, 1
      %p120 = por %p118, %p119
      %p121 = scmp.ne.s32.totalorder %s113, %s116
      %p122 = scmp.eq.s32.totalorder %s14, 0
      %p123 = por %p121, %p122
      %p124 = scmp.ne.s32.totalorder %s113, %s116
      %p125 = scmp.eq.s32.totalorder %s19, 1
      %p126 = por %p124, %p125
      %p127 = scmp.ne.s32.totalorder %s116, %s117
      %p128 = scmp.eq.s32.totalorder %s19, 0
      %p129 = por %p127, %p128
      %p130 = scmp.ne.s32.totalorder %s116, %s117
      %p131 = scmp.eq.s32.totalorder %s20, 1
      %p132 = por %p130, %p131
      %p134 = scmp.ne.s32.totalorder %s117, %s133
      %p135 = scmp.eq.s32.totalorder %s20, 0
      %p136 = por %p134, %p135
      %p137 = scmp.le.s32.totalorder 1, %s14
      %p138 = scmp.lt.s32.totalorder %s14, 3
      %p139 = pnand %p137, %p138
      %p140 = pneg %p139
      // Predicated region
      $region9: #{tpu_custom_call.1} parent=5 // pred_check
        _
      $region10: #{tpu_custom_call.1} parent=5 // pred_check_branch
        %142 = sbr.rel (%p139) target = $region12
      $region11: #{tpu_custom_call.1} parent=5 // pred_region
        %s143 = ssub.s32 %s14, 1
        // Predicated region
        $region13: #{tpu_custom_call.1} parent=11 // pred_check
          %p144 = pneg %p61
        $region14: #{tpu_custom_call.1} parent=11 // pred_check_branch
          %146 = sbr.rel (%p144) target = $region16
        $region15: #{tpu_custom_call.1} parent=11 // pred_region
          _
        $region16: #{tpu_custom_call.1} parent=11 // pred_fallthru
          _
        // Predicated region
        $region17: #{tpu_custom_call.1} parent=11 // pred_check
          %p147 = pneg %p82
        $region18: #{tpu_custom_call.1} parent=11 // pred_check_branch
          %149 = sbr.rel (%p147) target = $region20
        $region19: #{tpu_custom_call.1} parent=11 // pred_region
          _
        $region20: #{tpu_custom_call.1} parent=11 // pred_fallthru
          _
        // Predicated region
        $region21: #{tpu_custom_call.1} parent=11 // pred_check
          %p150 = pneg %p103
        $region22: #{tpu_custom_call.1} parent=11 // pred_check_branch
          %152 = sbr.rel (%p150) target = $region24
        $region23: #{tpu_custom_call.1} parent=11 // pred_region
          %154 = vsyncadd [#allocation5], 0
          %s155 = sshll.u32 %s3, 4
          %s156 = int_to_ptr.hbm [resolvable:$true] %s155
          %s157 = sshll.u32 [#allocation4], 4
          %s158 = int_to_ptr.vmem [resolvable:$true] %s157
          %163 = dma.hbm_to_vmem [thread:$0]  %s156, 512, %s158, [#allocation5], 256, 256, 16
        $region24: #{tpu_custom_call.1} parent=11 // pred_fallthru
          _
      $region12: #{tpu_custom_call.1} parent=5 // pred_fallthru
        _
      %p164 = scmp.lt.s32.totalorder %s14, 2
      // Predicated region
      $region25: #{tpu_custom_call.1} parent=5 // pred_check
        %p165 = pneg %p164
      $region26: #{tpu_custom_call.1} parent=5 // pred_check_branch
        %167 = sbr.rel (%p165) target = $region28
      $region27: #{tpu_custom_call.1} parent=5 // pred_region
        // Predicated region
        $region29: #{tpu_custom_call.1} parent=27 // pred_check
          %p168 = pneg %p34
        $region30: #{tpu_custom_call.1} parent=27 // pred_check_branch
          %170 = sbr.rel (%p168) target = $region32
        $region31: #{tpu_custom_call.1} parent=27 // pred_region
          %s171 = sand.u32 %s24, 1
          %s172 = scalar_lea.sflag [#allocation3], %s171
          %s173 = sand.u32 %s24, 1
          %s174 = smul.addr %s173, 16
          %s175 = scalar_lea.vmem [#allocation2], %s174
          %177 = vsyncadd %s172, 0
          %s178 = smul.addr %s14, 2
          %s179 = smul.addr %s178, 8
          %s180 = scalar_lea.hbm %s0, %s179
          %s182 = sshll.u32 %s180, 4
          %s183 = int_to_ptr.hbm [resolvable:$true] %s182
          %s184 = sshll.u32 %s175, 4
          %s185 = int_to_ptr.vmem [resolvable:$true] %s184
          %187 = dma.hbm_to_vmem [thread:$0]  %s183, 256, %s185, %s172
        $region32: #{tpu_custom_call.1} parent=27 // pred_fallthru
          _
      $region28: #{tpu_custom_call.1} parent=5 // pred_fallthru
        _
      %p188 = scmp.le.s32.totalorder 1, %s14
      %p189 = scmp.lt.s32.totalorder %s14, 3
      %p190 = pnand %p188, %p189
      %p191 = pneg %p190
      // Predicated region
      $region33: #{tpu_custom_call.1} parent=5 // pred_check
        _
      $region34: #{tpu_custom_call.1} parent=5 // pred_check_branch
        %193 = sbr.rel (%p190) target = $region36
      $region35: #{tpu_custom_call.1} parent=5 // pred_region
        %s194 = ssub.s32 %s14, 1
        %s195 = sand.u32 %s27, 1
        %s196 = scalar_lea.sflag [#allocation3], %s195
        %s197 = sand.u32 %s27, 1
        %s198 = smul.addr %s197, 16
        %s199 = scalar_lea.vmem [#allocation2], %s198
        // Predicated region
        $region37: #{tpu_custom_call.1} parent=35 // pred_check
          %p200 = pneg %p40
        $region38: #{tpu_custom_call.1} parent=35 // pred_check_branch
          %202 = sbr.rel (%p200) target = $region40
        $region39: #{tpu_custom_call.1} parent=35 // pred_region
          %204 = dma.done %s196, 256
        $region40: #{tpu_custom_call.1} parent=35 // pred_fallthru
          _
        // Predicated region
        $region41: #{tpu_custom_call.1} parent=35 // pred_check
          %p205 = pneg %p103
        $region42: #{tpu_custom_call.1} parent=35 // pred_check_branch
          %207 = sbr.rel (%p205) target = $region44
        $region43: #{tpu_custom_call.1} parent=35 // pred_region
          %209 = dma.done [#allocation5], 512
        $region44: #{tpu_custom_call.1} parent=35 // pred_fallthru
          _
        %s210 = sand.u32 %s27, 1
        %s211 = scalar_lea.sflag [#allocation3], %s210
        %s212 = sand.u32 %s27, 1
        %s213 = smul.addr %s212, 16
        %s214 = scalar_lea.vmem [#allocation2], %s213
        %p215 = pneg %p40
        %p216 = pneg %p37
        %p217 = pneg %p61
        %p218 = pneg %p58
        %p219 = pneg %p82
        %p220 = pneg %p79
        %p221 = pneg %p103
        %p222 = pneg %p100
        %p223 = pneg %p129
        %p224 = pneg %p126
        %p225 = scmp.lt.s32.totalorder %s19, 1
        %s226 = scalar_select %p225, %s19, 1
        %s227 = smul.addr %s226, 2
        %s228 = smul.addr %s227, 4
        %s229 = scalar_lea.vmem %s4, %s228
        %p230 = scmp.lt.s32.totalorder %s19, 1
        %s231 = scalar_select %p230, %s19, 1
        %s232 = smul.addr %s231, 2
        %s233 = smul.addr %s232, 4
        %s234 = scalar_lea.vmem %s4, %s233
        %v235 = vld [vmem:[%s199] sm:$0xff]
        %v236 = vld [vmem:[%s199 + $0x8] sm:$0xff]
        %v237 = vld [vmem:[#allocation4] sm:$0xff]
        %v238 = vld [vmem:[#allocation4 + $0x8] sm:$0xff]
        %v239 = vld [vmem:[#allocation4 + $0x10] sm:$0x1]
        %v240 = vld [vmem:[#allocation4 + $0x18] sm:$0x1]
        %241 = vrot.lane.b32.xlu0 %v235, 17
        %v242 = vpop.permute.xlu0 %241
        %243 = vrot.lane.b32.xlu0 %v236, 17
        %v244 = vpop.permute.xlu0 %243
        %v245 = vlaneseq
        %v246 = vand.u32 %v245, 127
        %vm247 = vcmp.lt.s32.totalorder %v246, 17
        %v248 = vsel %vm247, %v242, %v244
        %v249 = vsel %vm247, %v244, %v242
        %v250 = vperm.slane %v237, 0
        %v251 = vperm.slane %v238, 0
        %v252 = vmul.f32 %v249, %v250
        %v253 = vmul.f32 %v248, %v251
        %254 = vrot.lane.b32.xlu0 %v235, 16
        %v255 = vpop.permute.xlu0 %254
        %256 = vrot.lane.b32.xlu0 %v236, 16
        %v257 = vpop.permute.xlu0 %256
        %vm258 = vcmp.lt.s32.totalorder %v246, 16
        %v259 = vsel %vm258, %v255, %v257
        %v260 = vsel %vm258, %v257, %v255
        %v261 = vperm.slane %v237, 1
        %v262 = vperm.slane %v238, 1
        %v263 = vmul.f32 %v260, %v261
        %v264 = vmul.f32 %v259, %v262
        %265 = vrot.lane.b32.xlu0 %v235, 15
        %v266 = vpop.permute.xlu0 %265
        %267 = vrot.lane.b32.xlu0 %v236, 15
        %v268 = vpop.permute.xlu0 %267
        %vm269 = vcmp.lt.s32.totalorder %v246, 15
        %v270 = vsel %vm269, %v266, %v268
        %v271 = vsel %vm269, %v268, %v266
        %v272 = vperm.slane %v237, 2
        %v273 = vperm.slane %v238, 2
        %v274 = vmul.f32 %v271, %v272
        %v275 = vmul.f32 %v270, %v273
        %276 = vrot.lane.b32.xlu0 %v235, 1
        %v277 = vpop.permute.xlu0 %276
        %278 = vrot.lane.b32.xlu0 %v236, 1
        %v279 = vpop.permute.xlu0 %278
        %vm280 = vcmp.lt.s32.totalorder %v246, 1
        %v281 = vsel %vm280, %v277, %v279
        %v282 = vsel %vm280, %v279, %v277
        %v283 = vperm.slane %v237, 3
        %v284 = vperm.slane %v238, 3
        %v285 = vmul.f32 %v282, %v283
        %v286 = vmul.f32 %v281, %v284
        %287 = vrot.lane.b32.xlu0 %v235, 127
        %v288 = vpop.permute.xlu0 %287
        %289 = vrot.lane.b32.xlu0 %v236, 127
        %v290 = vpop.permute.xlu0 %289
        %vm291 = vcmp.lt.s32.totalorder %v246, 127
        %v292 = vsel %vm291, %v288, %v290
        %v293 = vsel %vm291, %v290, %v288
        %v294 = vperm.slane %v237, 5
        %v295 = vperm.slane %v238, 5
        %v296 = vmul.f32 %v292, %v294
        %v297 = vmul.f32 %v293, %v295
        %298 = vrot.lane.b32.xlu0 %v235, 113
        %v299 = vpop.permute.xlu0 %298
        %300 = vrot.lane.b32.xlu0 %v236, 113
        %v301 = vpop.permute.xlu0 %300
        %vm302 = vcmp.lt.s32.totalorder %v246, 113
        %v303 = vsel %vm302, %v299, %v301
        %v304 = vsel %vm302, %v301, %v299
        %v305 = vperm.slane %v237, 6
        %v306 = vperm.slane %v238, 6
        %v307 = vmul.f32 %v303, %v305
        %v308 = vmul.f32 %v304, %v306
        %309 = vrot.lane.b32.xlu0 %v235, 112
        %v310 = vpop.permute.xlu0 %309
        %311 = vrot.lane.b32.xlu0 %v236, 112
        %v312 = vpop.permute.xlu0 %311
        %vm313 = vcmp.lt.s32.totalorder %v246, 112
        %v314 = vsel %vm313, %v310, %v312
        %v315 = vsel %vm313, %v312, %v310
        %v316 = vperm.slane %v237, 7
        %v317 = vperm.slane %v238, 7
        %v318 = vmul.f32 %v314, %v316
        %v319 = vmul.f32 %v315, %v317
        %320 = vrot.lane.b32.xlu0 %v235, 111
        %v321 = vpop.permute.xlu0 %320
        %322 = vrot.lane.b32.xlu0 %v236, 111
        %v323 = vpop.permute.xlu0 %322
        %vm324 = vcmp.lt.s32.totalorder %v246, 111
        %v325 = vsel %vm324, %v321, %v323
        %v326 = vsel %vm324, %v323, %v321
        %v327 = vperm.slane %v239, 0
        %v328 = vperm.slane %v240, 0
        %v329 = vmul.f32 %v325, %v327
        %v330 = vmul.f32 %v326, %v328
        %v331 = vld [vmem:[%s1] sm:$0x7]
        %v332 = vld [vmem:[%s2] sm:$0x7]
        %334 = vset.pattern.permute.xlu0 0
        %335 = vperm.xlu0 %334, %v332
        %v336 = vpop.permute.xlu0 %335
        %vm338 = vcmask 588800
        %v340 = vsel %vm338, %v331, 0
        %342 = vmatpush.msra.mxu0 0.0
        %343 = vmatpush.msra.mxu0 0.0
        %344 = vmatpush.msra.mxu0 0.0
        %345 = vmatpush.msra.mxu0 0.0
        %346 = vmatpush.msra.mxu0 0.0
        %347 = vmatpush.msra.mxu0 0.0
        %348 = vmatpush.msra.mxu0 0.0
        %349 = vmatpush.msra.mxu0 %v329
        %350 = vmatpush.msra.mxu0 %v318
        %351 = vmatpush.msra.mxu0 %v307
        %352 = vmatpush.msra.mxu0 %v296
        %353 = vmatpush.msra.mxu0 %v235
        %354 = vmatpush.msra.mxu0 %v285
        %355 = vmatpush.msra.mxu0 %v274
        %356 = vmatpush.msra.mxu0 %v263
        %357 = vmatpush.msra.mxu0 %v252
        %358 = vmatmul.f32.gmra.mxu0 %v340
        %v359 = vpop.f32.mrf.mxu0
        %v360 = vadd.f32 %v336, %v359
        %361 = vdwg.mxu0
        %362 = vmatpush.msra.mxu0 0.0
        %363 = vmatpush.msra.mxu0 0.0
        %364 = vmatpush.msra.mxu0 0.0
        %365 = vmatpush.msra.mxu0 0.0
        %366 = vmatpush.msra.mxu0 0.0
        %367 = vmatpush.msra.mxu0 0.0
        %368 = vmatpush.msra.mxu0 0.0
        %369 = vmatpush.msra.mxu0 %v330
        %370 = vmatpush.msra.mxu0 %v319
        %371 = vmatpush.msra.mxu0 %v308
        %372 = vmatpush.msra.mxu0 %v297
        %373 = vmatpush.msra.mxu0 %v236
        %374 = vmatpush.msra.mxu0 %v286
        %375 = vmatpush.msra.mxu0 %v275
        %376 = vmatpush.msra.mxu0 %v264
        %377 = vmatpush.msra.mxu0 %v253
        %378 = vmatmul.f32.gmra.mxu0 %v340
        %v379 = vpop.f32.mrf.mxu0
        %v380 = vadd.f32 %v336, %v379
        %381 = vdwg.mxu0
        %v384 = vrot.slane %v380, 4
        %vm385 = vcmask 1043456
        %v386 = vsel %vm385, %v360, %v384
        %388 = vst [vmem:[%s234] sm:$0x77] %v386
        %p389 = scmp.lt.s32.totalorder %s19, 1
        %s390 = scalar_select %p389, %s19, 1
        %s391 = smul.addr %s390, 2
        %s392 = smul.addr %s391, 4
        %s393 = scalar_lea.vmem %s4, %s392
        // Predicated region
        $region45: #{tpu_custom_call.1} parent=35 // pred_check
          %p394 = pneg %p126
        $region46: #{tpu_custom_call.1} parent=35 // pred_check_branch
          %396 = sbr.rel (%p394) target = $region48
        $region47: #{tpu_custom_call.1} parent=35 // pred_region
          _
        $region48: #{tpu_custom_call.1} parent=35 // pred_fallthru
          _
      $region36: #{tpu_custom_call.1} parent=5 // pred_fallthru
        _
      %p397 = scmp.le.s32.totalorder 2, %s14
      // Predicated region
      $region49: #{tpu_custom_call.1} parent=5 // pred_check
        %p398 = pneg %p397
      $region50: #{tpu_custom_call.1} parent=5 // pred_check_branch
        %400 = sbr.rel (%p398) target = $region52
      $region51: #{tpu_custom_call.1} parent=5 // pred_region
        %s401 = ssub.s32 %s14, 2
        // Predicated region
        $region53: #{tpu_custom_call.1} parent=51 // pred_check
          %p402 = pneg %p132
        $region54: #{tpu_custom_call.1} parent=51 // pred_check_branch
          %404 = sbr.rel (%p402) target = $region56
        $region55: #{tpu_custom_call.1} parent=51 // pred_region
          %p405 = scmp.lt.s32.totalorder %s20, 1
          %s406 = scalar_select %p405, %s20, 1
          %s407 = smul.addr %s406, 2
          %s408 = smul.addr %s407, 4
          %s409 = scalar_lea.vmem %s4, %s408
        $region56: #{tpu_custom_call.1} parent=51 // pred_fallthru
          _
      $region52: #{tpu_custom_call.1} parent=5 // pred_fallthru
        _
    $region6: #{tpu_custom_call.1} parent=1 // loop_footer
      %s18 = sadd.s32 1, %s14
    $region7: #{tpu_custom_call.1} parent=1 // loop_footer_branch
      %13 = sbr.rel target = $region3
    $region8: #{tpu_custom_call.1} parent=1 // loop_exit
      _
    %410 = vsyncpa [#allocation3], 1
    %s411 = scalar_lea.sflag [#allocation3], 1
    %412 = vsyncpa %s411, 1
    %413 = vsyncpa [#allocation5], 1

</llo_original>
